<compile_context>
chip_gen: v7x
topology: tpu7x:2x2x1
jax: 0.10.0
libtpu: 0.0.40
codegen_flags: <defaults>
</compile_context>

<pallas_src>
import jax
import jax.numpy as jnp
from jax.experimental import pallas as pl
from jax.experimental.pallas import tpu as pltpu


def _gamma_blend_kernel(coef_ref, xs_ref, xt_ref, xmv_ref, o_ref):
    """Elementwise blend over one (TBT, S*C) tile.

    coef_ref : VMEM (TBT, 3) f32  -- per-row [c_s, c_mv, c_t]
    xs/xt/xmv: VMEM (TBT, S*C)    -- spatial / temporal / multiview features
    o_ref    : VMEM (TBT, S*C)    -- output (same dtype as inputs)
    """
    c_s = coef_ref[:, 0:1]    # (TBT, 1) -> lane-broadcast
    c_mv = coef_ref[:, 1:2]
    c_t = coef_ref[:, 2:3]
    # f32 coefficients promote bf16 inputs to f32 for the blend; the final
    # store casts back to the output dtype.
    out = c_s * xs_ref[...] + c_mv * xmv_ref[...] + c_t * xt_ref[...]
    o_ref[...] = out.astype(o_ref.dtype)


def _sublane_rows(dtype):
    """Native sublane packing: 8 rows for f32, 16 for bf16, 32 for int8/fp8."""
    itemsize = jnp.dtype(dtype).itemsize
    return 8 * max(1, 4 // max(1, itemsize))


def _round_up(v, m):
    return ((v + m - 1) // m) * m


def gamma_blender(x_spatial, x_temporal, x_multiview, image_only_indicator=None,
                  alpha_spatial_mv=0.0, alpha_spatial_temporal=0.0, gamma=0.0,
                  merge_strategy="learned_with_images",
                  target_tile_bytes=4 * 1024 * 1024,
                  min_grid=2,
                  donate_x_spatial=False):
    """3-D path of GammaBlender.forward: inputs are (BT, S, C)."""
    BT, S, C = x_spatial.shape
    SC = S * C
    itemsize = jnp.dtype(x_spatial.dtype).itemsize
    sub = _sublane_rows(x_spatial.dtype)

    # ---- scalar mix values + per-row gamma (negligible XLA work) -----------
    if merge_strategy == "fixed":
        a_mv = jnp.float32(alpha_spatial_mv)
        a_st = jnp.float32(alpha_spatial_temporal)
        g = jnp.full((BT,), jnp.float32(gamma), jnp.float32)
    elif merge_strategy == "learned":
        a_mv = jax.nn.sigmoid(jnp.float32(alpha_spatial_mv))
        a_st = jax.nn.sigmoid(jnp.float32(alpha_spatial_temporal))
        g = jnp.full((BT,), jax.nn.sigmoid(jnp.float32(gamma)), jnp.float32)
    elif merge_strategy == "learned_with_images":
        if image_only_indicator is None:
            raise ValueError("image_only_indicator required for learned_with_images")
        a_mv = jax.nn.sigmoid(jnp.float32(alpha_spatial_mv))
        a_st = jax.nn.sigmoid(jnp.float32(alpha_spatial_temporal))
        # Row-major (b, t) flatten -> matches PyTorch alpha.reshape(-1) for the
        # (B*T, S, C) frame ordering.
        ind = image_only_indicator.reshape(-1).astype(jnp.int32)
        assert ind.shape[0] == BT, "indicator must flatten to BT frames"
        g_learned = jax.nn.sigmoid(jnp.float32(gamma))
        g = jnp.where(ind == 0, jnp.float32(1.0),
                      jnp.where(ind == 1, jnp.float32(0.0), g_learned))
    else:
        raise ValueError(f"unknown merge_strategy {merge_strategy}")

    # ---- fold the blend into 3 per-row coefficients -------------------------
    # out = g*(a_mv*xs + (1-a_mv)*xmv) + (1-g)*(a_st*xs + (1-a_st)*xt)
    c_s = g * a_mv + (1.0 - g) * a_st
    c_mv = g * (1.0 - a_mv)
    c_t = (1.0 - g) * (1.0 - a_st)
    coef = jnp.stack([c_s, c_mv, c_t], axis=-1).astype(jnp.float32)  # (BT, 3)

    # ---- lane-dense 2-D layout (BT, S*C); bitcast for contiguous inputs -----
    xs2 = x_spatial.reshape(BT, SC)
    xt2 = x_temporal.reshape(BT, SC)
    xmv2 = x_multiview.reshape(BT, SC)

    # ---- tile sizing ---------------------------------------------------------
    # ~target_tile_bytes per tensor per grid step, rounded to the dtype's
    # sublane packing, and capped so the grid has >= min_grid steps whenever
    # BT allows (keeps both v7x TensorCores busy on this HBM-bound kernel).
    row_bytes = SC * itemsize
    tbt = max(1, int(target_tile_bytes) // max(1, row_bytes))
    if min_grid > 1 and BT > sub:
        cap = _round_up(pl.cdiv(BT, min_grid), sub)
        if cap < BT:
            tbt = min(tbt, cap)
    if tbt >= BT:
        tbt = BT                           # full-dim block -> always legal
    else:
        tbt = max(sub, (tbt // sub) * sub)  # sublane-packed multiple

    grid = (pl.cdiv(BT, tbt),)
    data_spec = pl.BlockSpec((tbt, SC), lambda i: (i, 0))
    coef_spec = pl.BlockSpec((tbt, 3), lambda i: (i, 0))

    # Advisory cost hint: 3 mul + 2 add per element, pure bandwidth otherwise.
    cost = pl.CostEstimate(
        flops=5 * BT * SC,
        transcendentals=0,
        bytes_accessed=4 * BT * SC * itemsize + BT * 3 * 4,
    )

    extra = {}
    if donate_x_spatial:
        # Input index 1 is xs2 (coef is input 0): reuse x_spatial's HBM slab
        # as the output buffer when the caller no longer needs x_spatial.
        extra["input_output_aliases"] = {1: 0}

    # TODO(synk): if v7x does not auto-shard the single "parallel" axis across
    # its 2 TensorCores, switch to pltpu.CORE_PARALLEL / a core_map mesh.
    out2 = pl.pallas_call(
        _gamma_blend_kernel,
        out_shape=jax.ShapeDtypeStruct((BT, SC), x_spatial.dtype),
        grid=grid,
        in_specs=[coef_spec, data_spec, data_spec, data_spec],
        out_specs=data_spec,
        compiler_params=pltpu.CompilerParams(
            dimension_semantics=("parallel",),
            # 4 big tensors x 2 pipeline buffers x <=4 MiB tiles = <=32 MiB,
            # well inside this limit even on v7x (64 MiB physical VMEM).
            vmem_limit_bytes=56 << 20),
        cost_estimate=cost,
        **extra,
    )(coef, xs2, xt2, xmv2)

    return out2.reshape(BT, S, C)


def _reference(x_spatial, x_temporal, x_multiview, image_only_indicator,
               alpha_spatial_mv, alpha_spatial_temporal, gamma):
    a_mv = jax.nn.sigmoid(jnp.float32(alpha_spatial_mv))
    a_st = jax.nn.sigmoid(jnp.float32(alpha_spatial_temporal))
    g_l = jax.nn.sigmoid(jnp.float32(gamma))
    ind = image_only_indicator.reshape(-1)
    g = jnp.where(ind == 0, 1.0, jnp.where(ind == 1, 0.0, g_l))[:, None, None]
    xs = x_spatial.astype(jnp.float32)
    x_smv = a_mv * xs + (1.0 - a_mv) * x_multiview.astype(jnp.float32)
    x_st = a_st * xs + (1.0 - a_st) * x_temporal.astype(jnp.float32)
    return g * x_smv + (1.0 - g) * x_st   # f32 reference


if __name__ == "__main__":
    key = jax.random.PRNGKey(0)
    alpha_spatial_mv = 0.5
    alpha_spatial_temporal = -0.25
    gamma_init = 0.75

    # ---- check 1: f32, B=2, T=4, S=8, C=128 (BT=8, single block) ------------
    B, T, S, C = 2, 4, 8, 128
    BT = B * T
    k1, k2, k3 = jax.random.split(key, 3)
    x_spatial = jax.random.normal(k1, (BT, S, C), jnp.float32)
    x_temporal = jax.random.normal(k2, (BT, S, C), jnp.float32)
    x_multiview = jax.random.normal(k3, (BT, S, C), jnp.float32)
    # indicator values: 0 = multiview-only, 1 = temporal-only, 2 = both
    image_only_indicator = jnp.array([[0, 1, 2, 2],
                                      [0, 1, 2, 0]], dtype=jnp.int32)  # (B, T)

    out = gamma_blender(x_spatial, x_temporal, x_multiview, image_only_indicator,
                        alpha_spatial_mv, alpha_spatial_temporal, gamma_init)
    out = jax.block_until_ready(out)
    ref = _reference(x_spatial, x_temporal, x_multiview, image_only_indicator,
                     alpha_spatial_mv, alpha_spatial_temporal, gamma_init)
    assert jnp.allclose(out.astype(jnp.float32), ref, atol=1e-5, rtol=1e-5), \
        "mismatch vs reference (f32, single block)"

    # ---- check 2: f32, multi-block / uneven grid (BT=20, tiny tiles) ---------
    B2, T2 = 4, 5   # BT=20, not a multiple of the 8-row sublane tile
    BT2 = B2 * T2
    k4, k5, k6, k7 = jax.random.split(jax.random.PRNGKey(1), 4)
    xs_b = jax.random.normal(k4, (BT2, S, C), jnp.float32)
    xt_b = jax.random.normal(k5, (BT2, S, C), jnp.float32)
    xmv_b = jax.random.normal(k6, (BT2, S, C), jnp.float32)
    ind_b = jax.random.randint(k7, (B2, T2), 0, 3).astype(jnp.int32)

    out_b = gamma_blender(xs_b, xt_b, xmv_b, ind_b,
                          alpha_spatial_mv, alpha_spatial_temporal, gamma_init,
                          target_tile_bytes=8 * S * C * 4)  # TBT=8 -> grid=(3,)
    out_b = jax.block_until_ready(out_b)
    ref_b = _reference(xs_b, xt_b, xmv_b, ind_b,
                       alpha_spatial_mv, alpha_spatial_temporal, gamma_init)
    assert jnp.allclose(out_b.astype(jnp.float32), ref_b, atol=1e-5, rtol=1e-5), \
        "mismatch vs reference (tiled / ragged path)"

    # ---- check 3: bf16, BT=24 -> grid>=2 path, 16-row sublane tiles ----------
    B3, T3 = 4, 6
    BT3 = B3 * T3
    k8, k9, k10, k11 = jax.random.split(jax.random.PRNGKey(2), 4)
    xs_c = jax.random.normal(k8, (BT3, S, C), jnp.float32).astype(jnp.bfloat16)
    xt_c = jax.random.normal(k9, (BT3, S, C), jnp.float32).astype(jnp.bfloat16)
    xmv_c = jax.random.normal(k10, (BT3, S, C), jnp.float32).astype(jnp.bfloat16)
    ind_c = jax.random.randint(k11, (B3, T3), 0, 3).astype(jnp.int32)

    out_c = gamma_blender(xs_c, xt_c, xmv_c, ind_c,
                          alpha_spatial_mv, alpha_spatial_temporal, gamma_init)
    out_c = jax.block_until_ready(out_c)
    assert out_c.dtype == jnp.bfloat16
    ref_c = _reference(xs_c, xt_c, xmv_c, ind_c,
                       alpha_spatial_mv, alpha_spatial_temporal, gamma_init)
    assert jnp.allclose(out_c.astype(jnp.float32), ref_c, atol=5e-2, rtol=5e-2), \
        "mismatch vs reference (bf16 path)"

    print("KERNEL_OK")
</pallas_src>

<mosaic_0001>
module attributes {stable_mosaic.version = 11 : i64} {
  func.func @_gamma_blend_kernel(%arg0: i32, %arg1: memref<8x3xf32, #tpu.memory_space<vmem>>, %arg2: memref<8x1024xf32, #tpu.memory_space<vmem>>, %arg3: memref<8x1024xf32, #tpu.memory_space<vmem>>, %arg4: memref<8x1024xf32, #tpu.memory_space<vmem>>, %arg5: memref<8x1024xf32, #tpu.memory_space<vmem>>) attributes {dimension_semantics = [#tpu.dimension_semantics<parallel>], iteration_bounds = array<i64: 1>, scalar_prefetch = 0 : i64, scratch_operands = 0 : i64, tpu.core_type = #tpu.core_type<tc>, window_params = [{transform_indices = @transform_0, window_bounds = array<i64: 8, 3>}, {transform_indices = @transform_1, window_bounds = array<i64: 8, 1024>}, {transform_indices = @transform_2, window_bounds = array<i64: 8, 1024>}, {transform_indices = @transform_3, window_bounds = array<i64: 8, 1024>}, {transform_indices = @transform_4, window_bounds = array<i64: 8, 1024>}]} {
    %c0 = arith.constant 0 : index
    %c0_0 = arith.constant 0 : index
    %0 = vector.load %arg1[%c0, %c0_0] : memref<8x3xf32, #tpu.memory_space<vmem>>, vector<8x1xf32>
    %c0_1 = arith.constant 0 : index
    %c1 = arith.constant 1 : index
    %1 = vector.load %arg1[%c0_1, %c1] : memref<8x3xf32, #tpu.memory_space<vmem>>, vector<8x1xf32>
    %c0_2 = arith.constant 0 : index
    %c2 = arith.constant 2 : index
    %2 = vector.load %arg1[%c0_2, %c2] : memref<8x3xf32, #tpu.memory_space<vmem>>, vector<8x1xf32>
    %c0_3 = arith.constant 0 : index
    %c0_4 = arith.constant 0 : index
    %3 = vector.load %arg2[%c0_3, %c0_4] : memref<8x1024xf32, #tpu.memory_space<vmem>>, vector<8x1024xf32>
    %4 = vector.broadcast %0 : vector<8x1xf32> to vector<8x1024xf32>
    %5 = arith.mulf %4, %3 : vector<8x1024xf32>
    %c0_5 = arith.constant 0 : index
    %c0_6 = arith.constant 0 : index
    %6 = vector.load %arg4[%c0_5, %c0_6] : memref<8x1024xf32, #tpu.memory_space<vmem>>, vector<8x1024xf32>
    %7 = vector.broadcast %1 : vector<8x1xf32> to vector<8x1024xf32>
    %8 = arith.mulf %7, %6 : vector<8x1024xf32>
    %9 = arith.addf %5, %8 : vector<8x1024xf32>
    %c0_7 = arith.constant 0 : index
    %c0_8 = arith.constant 0 : index
    %10 = vector.load %arg3[%c0_7, %c0_8] : memref<8x1024xf32, #tpu.memory_space<vmem>>, vector<8x1024xf32>
    %11 = vector.broadcast %2 : vector<8x1xf32> to vector<8x1024xf32>
    %12 = arith.mulf %11, %10 : vector<8x1024xf32>
    %13 = arith.addf %9, %12 : vector<8x1024xf32>
    %c0_9 = arith.constant 0 : index
    %c0_10 = arith.constant 0 : index
    %14 = vector.load %arg5[%c0_9, %c0_10] : memref<8x1024xf32, #tpu.memory_space<vmem>>, vector<8x1024xf32>
    tpu.vector_store %arg5[%c0_9, %c0_10], %13 {strides = array<i32>} : memref<8x1024xf32, #tpu.memory_space<vmem>>, vector<8x1024xf32>,
    return
  }
  func.func @transform_0(%arg0: i32) -> (i32, i32) {
    %c0_i32 = arith.constant 0 : i32
    %c0_i32_0 = arith.constant 0 : i32
    return %arg0, %c0_i32 : i32, i32
  }
  func.func @transform_1(%arg0: i32) -> (i32, i32) {
    %c0_i32 = arith.constant 0 : i32
    %c0_i32_0 = arith.constant 0 : i32
    return %arg0, %c0_i32 : i32, i32
  }
  func.func @transform_2(%arg0: i32) -> (i32, i32) {
    %c0_i32 = arith.constant 0 : i32
    %c0_i32_0 = arith.constant 0 : i32
    return %arg0, %c0_i32 : i32, i32
  }
  func.func @transform_3(%arg0: i32) -> (i32, i32) {
    %c0_i32 = arith.constant 0 : i32
    %c0_i32_0 = arith.constant 0 : i32
    return %arg0, %c0_i32 : i32, i32
  }
  func.func @transform_4(%arg0: i32) -> (i32, i32) {
    %c0_i32 = arith.constant 0 : i32
    %c0_i32_0 = arith.constant 0 : i32
    return %arg0, %c0_i32 : i32, i32
  }
}

</mosaic_0001>

<llo_original>
// kernel: tpu_custom_call.1
$region0: #{tpu_custom_call.1}
  #allocation0 [shape = 'u32[]', space=smem, size = 0x4, offset = 0x4, fixed_abs, tag = 'smem constant byte address 0x4 - core index']
  #allocation1 [shape = 'u32[144,128]{1,0:T(1,128)}', space=vmem, size = 0x12000, scoped, tag = 'internal scratch']
  %s0 = inlined_call_operand.vmem [shape: f32[8,3], index: 0, kind: input, shape index: {}]
  %s1 = inlined_call_operand.hbm [shape: f32[8,1024], index: 1, kind: input, shape index: {}]
  %s2 = inlined_call_operand.hbm [shape: f32[8,1024], index: 2, kind: input, shape index: {}]
  %s3 = inlined_call_operand.hbm [shape: f32[8,1024], index: 3, kind: input, shape index: {}]
  %s4 = inlined_call_operand.hbm [shape: f32[8,1024], index: 4, kind: output, shape index: {}]
  %s5 = sld [smem:[#allocation0]]
  $region38: #{tpu_custom_call.1} parent=0
    _
  %s7 = ssub.s32 1, %s5
  %s8 = scalar_select 0, %s7, %s5
  $region1: #{tpu_custom_call.1} parent=0
    #allocation2 [shape = 'u8[32768]{0}', space=vmem, size = 0x8000, scoped, tag = 'input window, operand 1, single buffered']
    #allocation3 [shape = 's32[1]{0}', space=sflag, size = 0x4, scoped, tag = 'scoped memory for tpu_custom_call.1']
    #allocation4 [shape = 's32[1]{0}', space=sflag, size = 0x4, scoped, tag = 'scoped memory for tpu_custom_call.1']
    #allocation5 [shape = 'u8[32768]{0}', space=vmem, size = 0x8000, scoped, tag = 'input window, operand 2, single buffered']
    #allocation6 [shape = 's32[1]{0}', space=sflag, size = 0x4, scoped, tag = 'scoped memory for tpu_custom_call.1']
    #allocation7 [shape = 'u8[32768]{0}', space=vmem, size = 0x8000, scoped, tag = 'input window, operand 3, single buffered']
    #allocation8 [shape = 'u8[32768]{0}', space=vmem, size = 0x8000, scoped, tag = 'output window, operand 0, single buffered']
    %9 = vsyncpa [#allocation3], 0
    %10 = vsyncpa [#allocation6], 0
    %11 = vsyncpa [#allocation4], 0
    // Predicated region
    $region2: #{tpu_custom_call.1} parent=1 // pred_check
      _
    $region3: #{tpu_custom_call.1} parent=1 // pred_check_branch
      %13 = sbr.rel (0) target = $region5
    $region4: #{tpu_custom_call.1} parent=1 // pred_region
      _
    $region5: #{tpu_custom_call.1} parent=1 // pred_fallthru
      _
    // Predicated region
    $region6: #{tpu_custom_call.1} parent=1 // pred_check
      _
    $region7: #{tpu_custom_call.1} parent=1 // pred_check_branch
      %15 = sbr.rel (0) target = $region9
    $region8: #{tpu_custom_call.1} parent=1 // pred_region
      %s17 = ssub.s32 1024, 1024
      %18 = vsyncadd [#allocation3], %s17
      %s20 = sshll.u32 [#allocation2], 4
      %s21 = int_to_ptr.vmem [resolvable:$true] %s20
      %23 = dma.hbm_to_vmem [thread:$0]  %s1, 1024, %s21, [#allocation3]
    $region9: #{tpu_custom_call.1} parent=1 // pred_fallthru
      _
    // Predicated region
    $region10: #{tpu_custom_call.1} parent=1 // pred_check
      _
    $region11: #{tpu_custom_call.1} parent=1 // pred_check_branch
      %25 = sbr.rel (0) target = $region13
    $region12: #{tpu_custom_call.1} parent=1 // pred_region
      %s27 = ssub.s32 1024, 1024
      %28 = vsyncadd [#allocation6], %s27
      %s30 = sshll.u32 [#allocation5], 4
      %s31 = int_to_ptr.vmem [resolvable:$true] %s30
      %33 = dma.hbm_to_vmem [thread:$0]  %s2, 1024, %s31, [#allocation6]
    $region13: #{tpu_custom_call.1} parent=1 // pred_fallthru
      _
    // Predicated region
    $region14: #{tpu_custom_call.1} parent=1 // pred_check
      _
    $region15: #{tpu_custom_call.1} parent=1 // pred_check_branch
      %35 = sbr.rel (0) target = $region17
    $region16: #{tpu_custom_call.1} parent=1 // pred_region
      %s37 = ssub.s32 1024, 1024
      %38 = vsyncadd [#allocation6], %s37
      %s40 = sshll.u32 [#allocation7], 4
      %s41 = int_to_ptr.vmem [resolvable:$true] %s40
      %43 = dma.hbm_to_vmem [thread:$0]  %s3, 1024, %s41, [#allocation6]
    $region17: #{tpu_custom_call.1} parent=1 // pred_fallthru
      _
    // Predicated region
    $region18: #{tpu_custom_call.1} parent=1 // pred_check
      _
    $region19: #{tpu_custom_call.1} parent=1 // pred_check_branch
      %45 = sbr.rel (0) target = $region21
    $region20: #{tpu_custom_call.1} parent=1 // pred_region
      %46 = dma.done [#allocation3], 1024
    $region21: #{tpu_custom_call.1} parent=1 // pred_fallthru
      _
    // Predicated region
    $region22: #{tpu_custom_call.1} parent=1 // pred_check
      _
    $region23: #{tpu_custom_call.1} parent=1 // pred_check_branch
      %48 = sbr.rel (0) target = $region25
    $region24: #{tpu_custom_call.1} parent=1 // pred_region
      %49 = dma.done [#allocation6], 1024
    $region25: #{tpu_custom_call.1} parent=1 // pred_fallthru
      _
    // Predicated region
    $region26: #{tpu_custom_call.1} parent=1 // pred_check
      _
    $region27: #{tpu_custom_call.1} parent=1 // pred_check_branch
      %51 = sbr.rel (0) target = $region29
    $region28: #{tpu_custom_call.1} parent=1 // pred_region
      %52 = dma.done [#allocation6], 1024
    $region29: #{tpu_custom_call.1} parent=1 // pred_fallthru
      _
    %v53 = vld [vmem:[%s0] sm:$0xff]
    %v54 = vld [vmem:[#allocation2] sm:$0xff]
    %v55 = vld [vmem:[#allocation2 + $0x8] sm:$0xff]
    %v56 = vld [vmem:[#allocation2 + $0x10] sm:$0xff]
    %v57 = vld [vmem:[#allocation2 + $0x18] sm:$0xff]
    %v58 = vld [vmem:[#allocation2 + $0x20] sm:$0xff]
    %v59 = vld [vmem:[#allocation2 + $0x28] sm:$0xff]
    %v60 = vld [vmem:[#allocation2 + $0x30] sm:$0xff]
    %v61 = vld [vmem:[#allocation2 + $0x38] sm:$0xff]
    %63 = vset.pattern.permute.xlu0 0
    %64 = vperm.xlu0 %63, %v53
    %v65 = vpop.permute.xlu0 %64
    %v67 = vmul.f32 %v65, %v54
    %v68 = vmul.f32 %v65, %v55
    %v69 = vmul.f32 %v65, %v56
    %v70 = vmul.f32 %v65, %v57
    %v71 = vmul.f32 %v65, %v58
    %v72 = vmul.f32 %v65, %v59
    %v73 = vmul.f32 %v65, %v60
    %v74 = vmul.f32 %v65, %v61
    %v75 = vld [vmem:[#allocation7] sm:$0xff]
    %v76 = vld [vmem:[#allocation7 + $0x8] sm:$0xff]
    %v77 = vld [vmem:[#allocation7 + $0x10] sm:$0xff]
    %v78 = vld [vmem:[#allocation7 + $0x18] sm:$0xff]
    %v79 = vld [vmem:[#allocation7 + $0x20] sm:$0xff]
    %v80 = vld [vmem:[#allocation7 + $0x28] sm:$0xff]
    %v81 = vld [vmem:[#allocation7 + $0x30] sm:$0xff]
    %v82 = vld [vmem:[#allocation7 + $0x38] sm:$0xff]
    %83 = vset.pattern.permute.xlu0 1
    %84 = vperm.xlu0 %83, %v53
    %v85 = vpop.permute.xlu0 %84
    %v87 = vmul.f32 %v85, %v75
    %v88 = vmul.f32 %v85, %v76
    %v89 = vmul.f32 %v85, %v77
    %v90 = vmul.f32 %v85, %v78
    %v91 = vmul.f32 %v85, %v79
    %v92 = vmul.f32 %v85, %v80
    %v93 = vmul.f32 %v85, %v81
    %v94 = vmul.f32 %v85, %v82
    %v95 = vadd.f32 %v67, %v87
    %v96 = vadd.f32 %v68, %v88
    %v97 = vadd.f32 %v69, %v89
    %v98 = vadd.f32 %v70, %v90
    %v99 = vadd.f32 %v71, %v91
    %v100 = vadd.f32 %v72, %v92
    %v101 = vadd.f32 %v73, %v93
    %v102 = vadd.f32 %v74, %v94
    %v103 = vld [vmem:[#allocation5] sm:$0xff]
    %v104 = vld [vmem:[#allocation5 + $0x8] sm:$0xff]
    %v105 = vld [vmem:[#allocation5 + $0x10] sm:$0xff]
    %v106 = vld [vmem:[#allocation5 + $0x18] sm:$0xff]
    %v107 = vld [vmem:[#allocation5 + $0x20] sm:$0xff]
    %v108 = vld [vmem:[#allocation5 + $0x28] sm:$0xff]
    %v109 = vld [vmem:[#allocation5 + $0x30] sm:$0xff]
    %v110 = vld [vmem:[#allocation5 + $0x38] sm:$0xff]
    %111 = vset.pattern.permute.xlu0 2
    %112 = vperm.xlu0 %111, %v53
    %v113 = vpop.permute.xlu0 %112
    %v115 = vmul.f32 %v113, %v103
    %v116 = vmul.f32 %v113, %v104
    %v117 = vmul.f32 %v113, %v105
    %v118 = vmul.f32 %v113, %v106
    %v119 = vmul.f32 %v113, %v107
    %v120 = vmul.f32 %v113, %v108
    %v121 = vmul.f32 %v113, %v109
    %v122 = vmul.f32 %v113, %v110
    %v123 = vadd.f32 %v95, %v115
    %v124 = vadd.f32 %v96, %v116
    %v125 = vadd.f32 %v97, %v117
    %v126 = vadd.f32 %v98, %v118
    %v127 = vadd.f32 %v99, %v119
    %v128 = vadd.f32 %v100, %v120
    %v129 = vadd.f32 %v101, %v121
    %v130 = vadd.f32 %v102, %v122
    %131 = vst [vmem:[#allocation8] sm:$0xff] %v123
    %132 = vst [vmem:[#allocation8 + $0x8] sm:$0xff] %v124
    %133 = vst [vmem:[#allocation8 + $0x10] sm:$0xff] %v125
    %134 = vst [vmem:[#allocation8 + $0x18] sm:$0xff] %v126
    %135 = vst [vmem:[#allocation8 + $0x20] sm:$0xff] %v127
    %136 = vst [vmem:[#allocation8 + $0x28] sm:$0xff] %v128
    %137 = vst [vmem:[#allocation8 + $0x30] sm:$0xff] %v129
    %138 = vst [vmem:[#allocation8 + $0x38] sm:$0xff] %v130
    // Predicated region
    $region30: #{tpu_custom_call.1} parent=1 // pred_check
      _
    $region31: #{tpu_custom_call.1} parent=1 // pred_check_branch
      %140 = sbr.rel (0) target = $region33
    $region32: #{tpu_custom_call.1} parent=1 // pred_region
      %s142 = ssub.s32 1024, 1024
      %143 = vsyncadd [#allocation4], %s142
      %s145 = sshll.u32 [#allocation8], 4
      %s146 = int_to_ptr.vmem [resolvable:$true] %s145
      %148 = dma.vmem_to_hbm [thread:$0]  %s146, 1024, %s4, [#allocation4]
    $region33: #{tpu_custom_call.1} parent=1 // pred_fallthru
      _
    // Predicated region
    $region34: #{tpu_custom_call.1} parent=1 // pred_check
      _
    $region35: #{tpu_custom_call.1} parent=1 // pred_check_branch
      %150 = sbr.rel (0) target = $region37
    $region36: #{tpu_custom_call.1} parent=1 // pred_region
      %151 = dma.done [#allocation4], 1024
    $region37: #{tpu_custom_call.1} parent=1 // pred_fallthru
      _
    %152 = vsyncpa [#allocation3], 1
    %153 = vsyncpa [#allocation6], 1
    %154 = vsyncpa [#allocation4], 1

</llo_original>
